<compile_context>
chip_gen: v7x
topology: tpu7x:2x2x1
jax: 0.10.0
libtpu: 0.0.40
codegen_flags: <defaults>
</compile_context>

<pallas_src>
import functools
import math

import jax
import jax.numpy as jnp
from jax import lax
from jax.experimental import pallas as pl
from jax.experimental.pallas import tpu as pltpu


def _round_up(x: int, m: int) -> int:
    return (x + m - 1) // m * m


def _triplet_kernel(aq_ref, pq_ref, ak_ref, pk_ref, nk_ref, out_ref, acc_ref,
                    *, inv_tau: float, n_pad_keys: int, mm_dtype):
    """grid = (num_q_blocks, num_k_blocks); the key axis (last) is the reduction."""
    k = pl.program_id(1)
    num_k = pl.num_programs(1)

    @pl.when(k == 0)
    def _init():
        acc_ref[...] = jnp.zeros_like(acc_ref)

    # ---- query block: L2-normalize anchor rows (f32 math, rsqrt on EUP) ----
    aq = aq_ref[...].astype(jnp.float32)
    ss_aq = jnp.sum(aq * aq, axis=1, keepdims=True)                  # (TQ, 1)
    anq = aq * lax.rsqrt(jnp.maximum(ss_aq, 1e-24))                  # eps=1e-12 on the norm

    # ---- key block: L2-normalize anchor / pos / neg rows ----
    ak = ak_ref[...].astype(jnp.float32)
    pk = pk_ref[...].astype(jnp.float32)
    nk = nk_ref[...].astype(jnp.float32)
    ank = ak * lax.rsqrt(jnp.maximum(jnp.sum(ak * ak, axis=1, keepdims=True), 1e-24))
    pnk = pk * lax.rsqrt(jnp.maximum(jnp.sum(pk * pk, axis=1, keepdims=True), 1e-24))
    nnk = nk * lax.rsqrt(jnp.maximum(jnp.sum(nk * nk, axis=1, keepdims=True), 1e-24))

    # ---- one fused MXU call: [TQ, D] x [3*TK, D] (contract dim 1 of both) ----
    rhs = jnp.concatenate([nnk, ank, pnk], axis=0).astype(mm_dtype)   # (3*TK, D)
    lhs = anq.astype(mm_dtype)                                        # (TQ, D)
    sims = lax.dot_general(lhs, rhs, (((1,), (1,)), ((), ())),
                           preferred_element_type=jnp.float32)        # (TQ, 3*TK)
    expd = jnp.exp(sims * inv_tau)                                    # single EUP pass
    acc_ref[...] += jnp.sum(expd, axis=1, keepdims=True)              # (TQ, 1)

    # ---- finalize on the last key block ----
    @pl.when(k == num_k - 1)
    def _finalize():
        pq = pq_ref[...].astype(jnp.float32)
        ss_pq = jnp.sum(pq * pq, axis=1, keepdims=True)
        pnq = pq * lax.rsqrt(jnp.maximum(ss_pq, 1e-24))

        # D1: torch.cosine_similarity (eps = 1e-8 on the norm product)
        dot_ap = jnp.sum(aq * pq, axis=1, keepdims=True)
        cos_ap = dot_ap / jnp.maximum(jnp.sqrt(ss_aq) * jnp.sqrt(ss_pq),
                                      jnp.float32(1e-8))
        d1 = jnp.exp(cos_ap * inv_tau)

        # analytic off-diagonal correction (replaces the [B, B] iota mask);
        # computed from data so an all-zero row (diag = exp(0) = 1) stays correct.
        diag_aa = jnp.exp(jnp.sum(anq * anq, axis=1, keepdims=True) * inv_tau)
        diag_ap = jnp.exp(jnp.sum(anq * pnq, axis=1, keepdims=True) * inv_tau)

        # zero-padded key rows normalize to 0 -> each contributes exp(0) = 1 to
        # every one of the 3 segments; subtract them analytically.
        pad_corr = jnp.float32(3.0 * n_pad_keys)

        denom = d1 + acc_ref[...] - diag_aa - diag_ap - pad_corr
        # -log(d1 / denom) == log(denom) - cos/tau
        out_ref[...] = (jnp.log(denom) - cos_ap * inv_tau).astype(out_ref.dtype)


def _pick_tiles(batch: int):
    if batch <= 256:
        t = _round_up(batch, 8)          # single tile each way for small batches
        return t, t
    # 3*TK = 1536 is a multiple of 256 (v6e/v7x MXU N-alignment) and of 128 (v5e);
    # sized to fit comfortably inside the 32 MiB scoped-VMEM default / v7x 64 MiB.
    return 256, 512


def triplet_loss_cossim_v2_plus3(anchor, pos, neg, *, temperature=1.0,
                                 reduction="mean", anchor_detach=True,
                                 block_q=None, block_k=None, mxu_dtype=None):
    """JAX/Pallas equivalent of TripletLossInLatentSpaceCosSimv2_plus3.forward.

    anchor, pos, neg: [B, D] arrays.  Returns a scalar (reduction 'mean'/'sum').
    mxu_dtype: optional dtype for the MXU operands (e.g. jnp.bfloat16); defaults
    to the input dtype so f32 inputs keep full precision.
    """
    if anchor_detach:
        anchor = lax.stop_gradient(anchor)

    B, D = anchor.shape
    assert pos.shape == (B, D) and neg.shape == (B, D)

    dbq, dbk = _pick_tiles(B)
    tq = int(block_q) if block_q is not None else dbq
    tk = int(block_k) if block_k is not None else dbk
    assert tq % 8 == 0 and tk % 8 == 0, "tile sizes must be multiples of 8"

    b_pad = _round_up(B, tq * tk // math.gcd(tq, tk))
    n_pad = b_pad - B
    if n_pad:
        pad = ((0, n_pad), (0, 0))
        anchor = jnp.pad(anchor, pad)
        pos = jnp.pad(pos, pad)
        neg = jnp.pad(neg, pad)

    mm_dtype = jnp.dtype(mxu_dtype) if mxu_dtype is not None else anchor.dtype

    kernel = functools.partial(
        _triplet_kernel,
        inv_tau=float(1.0 / float(temperature)),
        n_pad_keys=int(n_pad),
        mm_dtype=mm_dtype,
    )

    q_spec = pl.BlockSpec((tq, D), lambda i, k: (i, 0))
    k_spec = pl.BlockSpec((tk, D), lambda i, k: (k, 0))

    per_row = pl.pallas_call(
        kernel,
        out_shape=jax.ShapeDtypeStruct((b_pad, 1), jnp.float32),
        grid_spec=pltpu.PrefetchScalarGridSpec(
            num_scalar_prefetch=0,
            grid=(b_pad // tq, b_pad // tk),
            in_specs=[q_spec, q_spec, k_spec, k_spec, k_spec],
            out_specs=pl.BlockSpec((tq, 1), lambda i, k: (i, 0)),
            scratch_shapes=[pltpu.VMEM((tq, 1), jnp.float32)],
        ),
        compiler_params=pltpu.CompilerParams(
            dimension_semantics=("parallel", "arbitrary"),
            vmem_limit_bytes=48 * 1024 * 1024,
        ),
    )(anchor, pos, anchor, pos, neg)

    triplet = per_row[:B, 0]
    if reduction == "mean":
        return jnp.mean(triplet)
    elif reduction == "sum":
        return jnp.sum(triplet)
    raise ValueError(f"Invalid reduction: {reduction}")


# ----------------------------- pure-JAX reference ----------------------------
def _reference(a, p, n, tau=1.0, reduction="mean"):
    a = a.astype(jnp.float32); p = p.astype(jnp.float32); n = n.astype(jnp.float32)
    a_nrm = jnp.linalg.norm(a, axis=1)
    p_nrm = jnp.linalg.norm(p, axis=1)
    n_nrm = jnp.linalg.norm(n, axis=1)
    cos_ap = jnp.sum(a * p, axis=1) / jnp.maximum(a_nrm * p_nrm, 1e-8)
    d1 = jnp.exp(cos_ap / tau)
    an = a / jnp.maximum(a_nrm, 1e-12)[:, None]
    pn = p / jnp.maximum(p_nrm, 1e-12)[:, None]
    nn_ = n / jnp.maximum(n_nrm, 1e-12)[:, None]
    d2 = jnp.sum(jnp.exp(an @ nn_.T / tau), axis=1)
    s_aa = jnp.exp(an @ an.T / tau)
    d3 = jnp.sum(s_aa, axis=1) - jnp.diag(s_aa)
    s_ap = jnp.exp(an @ pn.T / tau)
    d4 = jnp.sum(s_ap, axis=1) - jnp.diag(s_ap)
    t = -jnp.log(d1 / (d1 + d2 + d3 + d4))
    return jnp.mean(t) if reduction == "mean" else jnp.sum(t)


if __name__ == "__main__":
    root = jax.random.PRNGKey(0)
    k1, k2, k3, k4, k5, k6 = jax.random.split(root, 6)

    # --- case 1: the module's small latent-space batch ---
    B, D = 8, 32
    anchor = jax.random.normal(k1, (B, D), dtype=jnp.float32)
    pos = jax.random.normal(k2, (B, D), dtype=jnp.float32)
    neg = jax.random.normal(k3, (B, D), dtype=jnp.float32)

    loss = triplet_loss_cossim_v2_plus3(anchor, pos, neg,
                                        temperature=1.0, anchor_detach=True)
    loss = jax.block_until_ready(loss)
    expected = _reference(anchor, pos, neg, tau=1.0)
    assert jnp.allclose(loss, expected, rtol=1e-5, atol=1e-5), (loss, expected)

    # --- case 2: exercise the tiled grid, key-axis accumulation and padding ---
    B2, D2 = 20, 64
    a2 = jax.random.normal(k4, (B2, D2), dtype=jnp.float32)
    p2 = jax.random.normal(k5, (B2, D2), dtype=jnp.float32)
    n2 = jax.random.normal(k6, (B2, D2), dtype=jnp.float32)

    loss2 = triplet_loss_cossim_v2_plus3(a2, p2, n2, temperature=0.5,
                                         block_q=8, block_k=16)
    loss2 = jax.block_until_ready(loss2)
    expected2 = _reference(a2, p2, n2, tau=0.5)
    assert jnp.allclose(loss2, expected2, rtol=1e-5, atol=1e-5), (loss2, expected2)

    print("KERNEL_OK")
</pallas_src>

<mosaic_0001>
module attributes {stable_mosaic.version = 11 : i64} {
  func.func @_triplet_kernel(%arg0: i32, %arg1: i32, %arg2: memref<8x32xf32, #tpu.memory_space<vmem>>, %arg3: memref<8x32xf32, #tpu.memory_space<vmem>>, %arg4: memref<8x32xf32, #tpu.memory_space<vmem>>, %arg5: memref<8x32xf32, #tpu.memory_space<vmem>>, %arg6: memref<8x32xf32, #tpu.memory_space<vmem>>, %arg7: memref<8x1xf32, #tpu.memory_space<vmem>>, %arg8: memref<8x1xf32, #tpu.memory_space<vmem>>) attributes {dimension_semantics = [#tpu.dimension_semantics<parallel>, #tpu.dimension_semantics<arbitrary>], iteration_bounds = array<i64: 1, 1>, scalar_prefetch = 0 : i64, scratch_operands = 1 : i64, tpu.core_type = #tpu.core_type<tc>, window_params = [{transform_indices = @transform_0, window_bounds = array<i64: 8, 32>}, {transform_indices = @transform_1, window_bounds = array<i64: 8, 32>}, {transform_indices = @transform_2, window_bounds = array<i64: 8, 32>}, {transform_indices = @transform_3, window_bounds = array<i64: 8, 32>}, {transform_indices = @transform_4, window_bounds = array<i64: 8, 32>}, {transform_indices = @transform_5, window_bounds = array<i64: 8, 1>}]} {
    %c0_i32 = arith.constant 0 : i32
    %0 = arith.cmpi eq, %arg1, %c0_i32 : i32
    %1 = arith.extui %0 : i1 to i32
    %c0_i32_0 = arith.constant 0 : i32
    %2 = arith.cmpi ne, %1, %c0_i32_0 : i32
    scf.if %2 {
      %cst_24 = arith.constant 0.000000e+00 : f32
      %52 = vector.broadcast %cst_24 : f32 to vector<8x1xf32>
      %c0_25 = arith.constant 0 : index
      %c0_26 = arith.constant 0 : index
      %53 = vector.load %arg8[%c0_25, %c0_26] : memref<8x1xf32, #tpu.memory_space<vmem>>, vector<8x1xf32>
      tpu.vector_store %arg8[%c0_25, %c0_26], %52 {strides = array<i32>} : memref<8x1xf32, #tpu.memory_space<vmem>>, vector<8x1xf32>,
    } else {
    }
    %c0 = arith.constant 0 : index
    %c0_1 = arith.constant 0 : index
    %3 = vector.load %arg2[%c0, %c0_1] : memref<8x32xf32, #tpu.memory_space<vmem>>, vector<8x32xf32>
    %4 = arith.mulf %3, %3 : vector<8x32xf32>
    %cst = arith.constant dense<0.000000e+00> : vector<8xf32>
    %5 = vector.multi_reduction <add>, %4, %cst [1] : vector<8x32xf32> to vector<8xf32>
    %6 = vector.shape_cast %5 : vector<8xf32> to vector<8x1xf32>
    %cst_2 = arith.constant 1.000000e-24 : f32
    %7 = vector.broadcast %cst_2 : f32 to vector<8x1xf32>
    %8 = arith.maximumf %6, %7 : vector<8x1xf32>
    %9 = math.rsqrt %8 : vector<8x1xf32>
    %10 = vector.broadcast %9 : vector<8x1xf32> to vector<8x32xf32>
    %11 = arith.mulf %3, %10 : vector<8x32xf32>
    %c0_3 = arith.constant 0 : index
    %c0_4 = arith.constant 0 : index
    %12 = vector.load %arg4[%c0_3, %c0_4] : memref<8x32xf32, #tpu.memory_space<vmem>>, vector<8x32xf32>
    %c0_5 = arith.constant 0 : index
    %c0_6 = arith.constant 0 : index
    %13 = vector.load %arg5[%c0_5, %c0_6] : memref<8x32xf32, #tpu.memory_space<vmem>>, vector<8x32xf32>
    %c0_7 = arith.constant 0 : index
    %c0_8 = arith.constant 0 : index
    %14 = vector.load %arg6[%c0_7, %c0_8] : memref<8x32xf32, #tpu.memory_space<vmem>>, vector<8x32xf32>
    %15 = arith.mulf %12, %12 : vector<8x32xf32>
    %cst_9 = arith.constant dense<0.000000e+00> : vector<8xf32>
    %16 = vector.multi_reduction <add>, %15, %cst_9 [1] : vector<8x32xf32> to vector<8xf32>
    %17 = vector.shape_cast %16 : vector<8xf32> to vector<8x1xf32>
    %cst_10 = arith.constant 1.000000e-24 : f32
    %18 = vector.broadcast %cst_10 : f32 to vector<8x1xf32>
    %19 = arith.maximumf %17, %18 : vector<8x1xf32>
    %20 = math.rsqrt %19 : vector<8x1xf32>
    %21 = vector.broadcast %20 : vector<8x1xf32> to vector<8x32xf32>
    %22 = arith.mulf %12, %21 : vector<8x32xf32>
    %23 = arith.mulf %13, %13 : vector<8x32xf32>
    %cst_11 = arith.constant dense<0.000000e+00> : vector<8xf32>
    %24 = vector.multi_reduction <add>, %23, %cst_11 [1] : vector<8x32xf32> to vector<8xf32>
    %25 = vector.shape_cast %24 : vector<8xf32> to vector<8x1xf32>
    %cst_12 = arith.constant 1.000000e-24 : f32
    %26 = vector.broadcast %cst_12 : f32 to vector<8x1xf32>
    %27 = arith.maximumf %25, %26 : vector<8x1xf32>
    %28 = math.rsqrt %27 : vector<8x1xf32>
    %29 = vector.broadcast %28 : vector<8x1xf32> to vector<8x32xf32>
    %30 = arith.mulf %13, %29 : vector<8x32xf32>
    %31 = arith.mulf %14, %14 : vector<8x32xf32>
    %cst_13 = arith.constant dense<0.000000e+00> : vector<8xf32>
    %32 = vector.multi_reduction <add>, %31, %cst_13 [1] : vector<8x32xf32> to vector<8xf32>
    %33 = vector.shape_cast %32 : vector<8xf32> to vector<8x1xf32>
    %cst_14 = arith.constant 1.000000e-24 : f32
    %34 = vector.broadcast %cst_14 : f32 to vector<8x1xf32>
    %35 = arith.maximumf %33, %34 : vector<8x1xf32>
    %36 = math.rsqrt %35 : vector<8x1xf32>
    %37 = vector.broadcast %36 : vector<8x1xf32> to vector<8x32xf32>
    %38 = arith.mulf %14, %37 : vector<8x32xf32>
    %39 = tpu.concatenate %38, %22, %30 in 0 : vector<8x32xf32>, vector<8x32xf32>, vector<8x32xf32> -> vector<24x32xf32>
    %cst_15 = arith.constant dense<0.000000e+00> : vector<8x24xf32>
    %40 = tpu.matmul %11, %39, %cst_15 {dimension_numbers = #tpu.dot_dimension_numbers<[1], [1], [0], [0], [0, 0, 1, 0], [], []>} : vector<8x32xf32>, vector<24x32xf32>, vector<8x24xf32> -> vector<8x24xf32>
    %cst_16 = arith.constant 1.000000e+00 : f32
    %41 = vector.broadcast %cst_16 : f32 to vector<8x24xf32>
    %42 = arith.mulf %40, %41 : vector<8x24xf32>
    %43 = math.exp %42 : vector<8x24xf32>
    %c0_17 = arith.constant 0 : index
    %c0_18 = arith.constant 0 : index
    %44 = vector.load %arg8[%c0_17, %c0_18] : memref<8x1xf32, #tpu.memory_space<vmem>>, vector<8x1xf32>
    %cst_19 = arith.constant dense<0.000000e+00> : vector<8xf32>
    %45 = vector.multi_reduction <add>, %43, %cst_19 [1] : vector<8x24xf32> to vector<8xf32>
    %46 = vector.shape_cast %45 : vector<8xf32> to vector<8x1xf32>
    %47 = arith.addf %44, %46 : vector<8x1xf32>
    %c0_20 = arith.constant 0 : index
    %c0_21 = arith.constant 0 : index
    %48 = vector.load %arg8[%c0_20, %c0_21] : memref<8x1xf32, #tpu.memory_space<vmem>>, vector<8x1xf32>
    tpu.vector_store %arg8[%c0_20, %c0_21], %47 {strides = array<i32>} : memref<8x1xf32, #tpu.memory_space<vmem>>, vector<8x1xf32>,
    %c0_i32_22 = arith.constant 0 : i32
    %49 = arith.cmpi eq, %arg1, %c0_i32_22 : i32
    %50 = arith.extui %49 : i1 to i32
    %c0_i32_23 = arith.constant 0 : i32
    %51 = arith.cmpi ne, %50, %c0_i32_23 : i32
    scf.if %51 {
      %c0_24 = arith.constant 0 : index
      %c0_25 = arith.constant 0 : index
      %52 = vector.load %arg3[%c0_24, %c0_25] : memref<8x32xf32, #tpu.memory_space<vmem>>, vector<8x32xf32>
      %53 = arith.mulf %52, %52 : vector<8x32xf32>
      %cst_26 = arith.constant dense<0.000000e+00> : vector<8xf32>
      %54 = vector.multi_reduction <add>, %53, %cst_26 [1] : vector<8x32xf32> to vector<8xf32>
      %55 = vector.shape_cast %54 : vector<8xf32> to vector<8x1xf32>
      %cst_27 = arith.constant 1.000000e-24 : f32
      %56 = vector.broadcast %cst_27 : f32 to vector<8x1xf32>
      %57 = arith.maximumf %55, %56 : vector<8x1xf32>
      %58 = math.rsqrt %57 : vector<8x1xf32>
      %59 = vector.broadcast %58 : vector<8x1xf32> to vector<8x32xf32>
      %60 = arith.mulf %52, %59 : vector<8x32xf32>
      %61 = arith.mulf %3, %52 : vector<8x32xf32>
      %cst_28 = arith.constant dense<0.000000e+00> : vector<8xf32>
      %62 = vector.multi_reduction <add>, %61, %cst_28 [1] : vector<8x32xf32> to vector<8xf32>
      %63 = vector.shape_cast %62 : vector<8xf32> to vector<8x1xf32>
      %64 = math.sqrt %6 : vector<8x1xf32>
      %65 = math.sqrt %55 : vector<8x1xf32>
      %66 = arith.mulf %64, %65 : vector<8x1xf32>
      %cst_29 = arith.constant 9.99999993E-9 : f32
      %67 = vector.broadcast %cst_29 : f32 to vector<8x1xf32>
      %68 = arith.maximumf %66, %67 : vector<8x1xf32>
      %69 = arith.divf %63, %68 : vector<8x1xf32>
      %cst_30 = arith.constant 1.000000e+00 : f32
      %70 = vector.broadcast %cst_30 : f32 to vector<8x1xf32>
      %71 = arith.mulf %69, %70 : vector<8x1xf32>
      %72 = math.exp %71 : vector<8x1xf32>
      %73 = arith.mulf %11, %11 : vector<8x32xf32>
      %cst_31 = arith.constant dense<0.000000e+00> : vector<8xf32>
      %74 = vector.multi_reduction <add>, %73, %cst_31 [1] : vector<8x32xf32> to vector<8xf32>
      %75 = vector.shape_cast %74 : vector<8xf32> to vector<8x1xf32>
      %cst_32 = arith.constant 1.000000e+00 : f32
      %76 = vector.broadcast %cst_32 : f32 to vector<8x1xf32>
      %77 = arith.mulf %75, %76 : vector<8x1xf32>
      %78 = math.exp %77 : vector<8x1xf32>
      %79 = arith.mulf %11, %60 : vector<8x32xf32>
      %cst_33 = arith.constant dense<0.000000e+00> : vector<8xf32>
      %80 = vector.multi_reduction <add>, %79, %cst_33 [1] : vector<8x32xf32> to vector<8xf32>
      %81 = vector.shape_cast %80 : vector<8xf32> to vector<8x1xf32>
      %cst_34 = arith.constant 1.000000e+00 : f32
      %82 = vector.broadcast %cst_34 : f32 to vector<8x1xf32>
      %83 = arith.mulf %81, %82 : vector<8x1xf32>
      %84 = math.exp %83 : vector<8x1xf32>
      %c0_35 = arith.constant 0 : index
      %c0_36 = arith.constant 0 : index
      %85 = vector.load %arg8[%c0_35, %c0_36] : memref<8x1xf32, #tpu.memory_space<vmem>>, vector<8x1xf32>
      %86 = arith.addf %72, %85 : vector<8x1xf32>
      %87 = arith.subf %86, %78 : vector<8x1xf32>
      %88 = arith.subf %87, %84 : vector<8x1xf32>
      %cst_37 = arith.constant 0.000000e+00 : f32
      %89 = vector.broadcast %cst_37 : f32 to vector<8x1xf32>
      %90 = arith.subf %88, %89 : vector<8x1xf32>
      %91 = math.log %90 : vector<8x1xf32>
      %cst_38 = arith.constant 1.000000e+00 : f32
      %92 = vector.broadcast %cst_38 : f32 to vector<8x1xf32>
      %93 = arith.mulf %69, %92 : vector<8x1xf32>
      %94 = arith.subf %91, %93 : vector<8x1xf32>
      %c0_39 = arith.constant 0 : index
      %c0_40 = arith.constant 0 : index
      %95 = vector.load %arg7[%c0_39, %c0_40] : memref<8x1xf32, #tpu.memory_space<vmem>>, vector<8x1xf32>
      tpu.vector_store %arg7[%c0_39, %c0_40], %94 {strides = array<i32>} : memref<8x1xf32, #tpu.memory_space<vmem>>, vector<8x1xf32>,
    } else {
    }
    return
  }
  func.func @transform_0(%arg0: i32, %arg1: i32) -> (i32, i32) {
    %c0_i32 = arith.constant 0 : i32
    %c0_i32_0 = arith.constant 0 : i32
    return %arg0, %c0_i32 : i32, i32
  }
  func.func @transform_1(%arg0: i32, %arg1: i32) -> (i32, i32) {
    %c0_i32 = arith.constant 0 : i32
    %c0_i32_0 = arith.constant 0 : i32
    return %arg0, %c0_i32 : i32, i32
  }
  func.func @transform_2(%arg0: i32, %arg1: i32) -> (i32, i32) {
    %c0_i32 = arith.constant 0 : i32
    %c0_i32_0 = arith.constant 0 : i32
    return %arg1, %c0_i32 : i32, i32
  }
  func.func @transform_3(%arg0: i32, %arg1: i32) -> (i32, i32) {
    %c0_i32 = arith.constant 0 : i32
    %c0_i32_0 = arith.constant 0 : i32
    return %arg1, %c0_i32 : i32, i32
  }
  func.func @transform_4(%arg0: i32, %arg1: i32) -> (i32, i32) {
    %c0_i32 = arith.constant 0 : i32
    %c0_i32_0 = arith.constant 0 : i32
    return %arg1, %c0_i32 : i32, i32
  }
  func.func @transform_5(%arg0: i32, %arg1: i32) -> (i32, i32) {
    %c0_i32 = arith.constant 0 : i32
    %c0_i32_0 = arith.constant 0 : i32
    return %arg0, %c0_i32 : i32, i32
  }
}

</mosaic_0001>

<llo_original>
// kernel: tpu_custom_call.1
$region0: #{tpu_custom_call.1}
  #allocation0 [shape = 'u32[]', space=smem, size = 0x4, offset = 0x4, fixed_abs, tag = 'smem constant byte address 0x4 - core index']
  #allocation1 [shape = 'u32[144,128]{1,0:T(1,128)}', space=vmem, size = 0x12000, scoped, tag = 'internal scratch']
  #allocation2 [shape = 'f32[8,1]{1,0:T(8,128)}', space=vmem, size = 0x1000, scoped, tag = 'scratch operand']
  %s0 = inlined_call_operand.hbm [shape: f32[8,32], index: 0, kind: input, shape index: {}]
  %s1 = inlined_call_operand.hbm [shape: f32[8,32], index: 1, kind: input, shape index: {}]
  %s2 = inlined_call_operand.hbm [shape: f32[8,32], index: 2, kind: input, shape index: {}]
  %s3 = inlined_call_operand.vmem [shape: f32[8,32], index: 3, kind: input, shape index: {}]
  %s4 = inlined_call_operand.hbm [shape: f32[8,32], index: 4, kind: input, shape index: {}]
  %s5 = inlined_call_operand.vmem [shape: f32[8,1], index: 5, kind: output, shape index: {}]
  %s6 = sld [smem:[#allocation0]]
  $region54: #{tpu_custom_call.1} parent=0
    _
  %s8 = ssub.s32 1, %s6
  %s9 = scalar_select 0, %s8, %s6
  $region1: #{tpu_custom_call.1} parent=0
    #allocation3 [shape = 'u8[4096]{0}', space=vmem, size = 0x1000, scoped, tag = 'input window, operand 0, single buffered']
    #allocation4 [shape = 's32[1]{0}', space=sflag, size = 0x4, scoped, tag = 'scoped memory for tpu_custom_call.1']
    #allocation5 [shape = 'u8[4096]{0}', space=vmem, size = 0x1000, scoped, tag = 'input window, operand 1, single buffered']
    #allocation6 [shape = 's32[1]{0}', space=sflag, size = 0x4, scoped, tag = 'scoped memory for tpu_custom_call.1']
    #allocation7 [shape = 'u8[4096]{0}', space=vmem, size = 0x1000, scoped, tag = 'input window, operand 2, single buffered']
    #allocation8 [shape = 'u8[4096]{0}', space=vmem, size = 0x1000, scoped, tag = 'input window, operand 4, single buffered']
    #allocation9 [shape = 's32[1]{0}', space=sflag, size = 0x4, scoped, tag = 'scoped memory for tpu_custom_call.1']
    %10 = vsyncpa [#allocation4], 0
    %11 = vsyncpa [#allocation6], 0
    %12 = vsyncpa [#allocation9], 0
    // Predicated region
    $region2: #{tpu_custom_call.1} parent=1 // pred_check
      _
    $region3: #{tpu_custom_call.1} parent=1 // pred_check_branch
      %14 = sbr.rel (0) target = $region5
    $region4: #{tpu_custom_call.1} parent=1 // pred_region
      %s16 = ssub.s32 128, 128
      %17 = vsyncadd [#allocation4], %s16
      %s19 = sshll.u32 [#allocation3], 4
      %s20 = int_to_ptr.vmem [resolvable:$true] %s19
      %22 = dma.hbm_to_vmem [thread:$0]  %s0, 128, %s20, [#allocation4]
    $region5: #{tpu_custom_call.1} parent=1 // pred_fallthru
      _
    // Predicated region
    $region6: #{tpu_custom_call.1} parent=1 // pred_check
      _
    $region7: #{tpu_custom_call.1} parent=1 // pred_check_branch
      %24 = sbr.rel (0) target = $region9
    $region8: #{tpu_custom_call.1} parent=1 // pred_region
      %s26 = ssub.s32 128, 128
      %27 = vsyncadd [#allocation6], %s26
      %s29 = sshll.u32 [#allocation5], 4
      %s30 = int_to_ptr.vmem [resolvable:$true] %s29
      %32 = dma.hbm_to_vmem [thread:$0]  %s1, 128, %s30, [#allocation6]
    $region9: #{tpu_custom_call.1} parent=1 // pred_fallthru
      _
    // Predicated region
    $region10: #{tpu_custom_call.1} parent=1 // pred_check
      _
    $region11: #{tpu_custom_call.1} parent=1 // pred_check_branch
      %34 = sbr.rel (0) target = $region13
    $region12: #{tpu_custom_call.1} parent=1 // pred_region
      %s36 = ssub.s32 128, 128
      %37 = vsyncadd [#allocation6], %s36
      %s39 = sshll.u32 [#allocation7], 4
      %s40 = int_to_ptr.vmem [resolvable:$true] %s39
      %42 = dma.hbm_to_vmem [thread:$0]  %s2, 128, %s40, [#allocation6]
    $region13: #{tpu_custom_call.1} parent=1 // pred_fallthru
      _
    // Predicated region
    $region14: #{tpu_custom_call.1} parent=1 // pred_check
      _
    $region15: #{tpu_custom_call.1} parent=1 // pred_check_branch
      %44 = sbr.rel (0) target = $region17
    $region16: #{tpu_custom_call.1} parent=1 // pred_region
      _
    $region17: #{tpu_custom_call.1} parent=1 // pred_fallthru
      _
    // Predicated region
    $region18: #{tpu_custom_call.1} parent=1 // pred_check
      _
    $region19: #{tpu_custom_call.1} parent=1 // pred_check_branch
      %46 = sbr.rel (0) target = $region21
    $region20: #{tpu_custom_call.1} parent=1 // pred_region
      %s48 = ssub.s32 128, 128
      %49 = vsyncadd [#allocation9], %s48
      %s51 = sshll.u32 [#allocation8], 4
      %s52 = int_to_ptr.vmem [resolvable:$true] %s51
      %54 = dma.hbm_to_vmem [thread:$0]  %s4, 128, %s52, [#allocation9]
    $region21: #{tpu_custom_call.1} parent=1 // pred_fallthru
      _
    // Predicated region
    $region22: #{tpu_custom_call.1} parent=1 // pred_check
      _
    $region23: #{tpu_custom_call.1} parent=1 // pred_check_branch
      %56 = sbr.rel (0) target = $region25
    $region24: #{tpu_custom_call.1} parent=1 // pred_region
      %57 = dma.done [#allocation4], 128
    $region25: #{tpu_custom_call.1} parent=1 // pred_fallthru
      _
    // Predicated region
    $region26: #{tpu_custom_call.1} parent=1 // pred_check
      _
    $region27: #{tpu_custom_call.1} parent=1 // pred_check_branch
      %59 = sbr.rel (0) target = $region29
    $region28: #{tpu_custom_call.1} parent=1 // pred_region
      %60 = dma.done [#allocation6], 128
    $region29: #{tpu_custom_call.1} parent=1 // pred_fallthru
      _
    // Predicated region
    $region30: #{tpu_custom_call.1} parent=1 // pred_check
      _
    $region31: #{tpu_custom_call.1} parent=1 // pred_check_branch
      %62 = sbr.rel (0) target = $region33
    $region32: #{tpu_custom_call.1} parent=1 // pred_region
      %63 = dma.done [#allocation6], 128
    $region33: #{tpu_custom_call.1} parent=1 // pred_fallthru
      _
    // Predicated region
    $region34: #{tpu_custom_call.1} parent=1 // pred_check
      _
    $region35: #{tpu_custom_call.1} parent=1 // pred_check_branch
      %65 = sbr.rel (0) target = $region37
    $region36: #{tpu_custom_call.1} parent=1 // pred_region
      %66 = dma.done [#allocation9], 128
    $region37: #{tpu_custom_call.1} parent=1 // pred_fallthru
      _
    %p67 = scmp.eq.s32.totalorder 0, 0
    // Predicated region
    $region38: #{tpu_custom_call.1} parent=1 // pred_check
      %p68 = pneg %p67
    $region39: #{tpu_custom_call.1} parent=1 // pred_check_branch
      %70 = sbr.rel (%p68) target = $region41
    $region40: #{tpu_custom_call.1} parent=1 // pred_region
      %vm71 = vcmask 7168
      %72 = vst.msk [vmem:[#allocation2] sm:$0xff] %vm71, 0.0
    $region41: #{tpu_custom_call.1} parent=1 // pred_fallthru
      _
    %v73 = vld [vmem:[#allocation3] sm:$0xff]
    %v74 = vmul.f32 %v73, %v73
    %vm75 = vcmask 261120
    %v76 = vsel %vm75, %v74, 0.0
    %77 = vadd.xlane.f32.xlu0 %v76
    %v78 = vpop.xlane.xlu0 %77
    %v79 = vmax.f32 %v78, 1e-24
    %v80 = vrsqrt.pop %v79
    %v81 = vmul.f32 %v73, %v80
    %v82 = vld [vmem:[#allocation7] sm:$0xff]
    %v83 = vld [vmem:[%s3] sm:$0xff]
    %v84 = vld [vmem:[#allocation8] sm:$0xff]
    %v85 = vmul.f32 %v82, %v82
    %v86 = vsel %vm75, %v85, 0.0
    %87 = vadd.xlane.f32.xlu0 %v86
    %v88 = vpop.xlane.xlu0 %87
    %v89 = vmax.f32 %v88, 1e-24
    %v90 = vrsqrt.pop %v89
    %v91 = vmul.f32 %v82, %v90
    %v92 = vmul.f32 %v83, %v83
    %v93 = vsel %vm75, %v92, 0.0
    %94 = vadd.xlane.f32.xlu0 %v93
    %v95 = vpop.xlane.xlu0 %94
    %v96 = vmax.f32 %v95, 1e-24
    %v97 = vrsqrt.pop %v96
    %v98 = vmul.f32 %v83, %v97
    %v99 = vmul.f32 %v84, %v84
    %v100 = vsel %vm75, %v99, 0.0
    %101 = vadd.xlane.f32.xlu0 %v100
    %v102 = vpop.xlane.xlu0 %101
    %v103 = vmax.f32 %v102, 1e-24
    %v104 = vrsqrt.pop %v103
    %v105 = vmul.f32 %v84, %v104
    %v107 = vsel %vm75, %v81, 0
    %v110 = vsel %vm75, %v105, 0
    %v113 = vsel %vm75, %v91, 0
    %v116 = vsel %vm75, %v98, 0
    %118 = vmatprep.subr.mxu0 0.0
    %119 = vmatpush1.xpose.msra.mxu0 %v110
    %120 = vmatprep.subr.mxu0 0.0
    %121 = vmatpush1.xpose.msra.mxu0 %v113
    %122 = vmatprep.subr.mxu0 0.0
    %123 = vmatpush1.xpose.msra.mxu0 %v116
    %124 = vmatprep.subr.mxu0 0.0
    %125 = vmatpush1.xpose.msra.mxu0 0.0
    %126 = vmatprep.subr.mxu0 0.0
    %127 = vmatpush1.xpose.msra.mxu0 0.0
    %128 = vmatprep.subr.mxu0 0.0
    %129 = vmatpush1.xpose.msra.mxu0 0.0
    %130 = vmatprep.subr.mxu0 0.0
    %131 = vmatpush1.xpose.msra.mxu0 0.0
    %132 = vmatprep.subr.mxu0 0.0
    %133 = vmatpush1.xpose.msra.mxu0 0.0
    %134 = vmatprep.subr.mxu0 0.0
    %135 = vmatpush1.xpose.msra.mxu0 0.0
    %136 = vmatprep.subr.mxu0 0.0
    %137 = vmatpush1.xpose.msra.mxu0 0.0
    %138 = vmatprep.subr.mxu0 0.0
    %139 = vmatpush1.xpose.msra.mxu0 0.0
    %140 = vmatprep.subr.mxu0 0.0
    %141 = vmatpush1.xpose.msra.mxu0 0.0
    %142 = vmatprep.subr.mxu0 0.0
    %143 = vmatpush1.xpose.msra.mxu0 0.0
    %144 = vmatprep.subr.mxu0 0.0
    %145 = vmatpush1.xpose.msra.mxu0 0.0
    %146 = vmatprep.subr.mxu0 0.0
    %147 = vmatpush1.xpose.msra.mxu0 0.0
    %148 = vmatprep.subr.mxu0 0.0
    %149 = vmatpush1.xpose.msra.mxu0 0.0
    %150 = vmatprep.subr.mxu0 0.0
    %151 = vmatpush1.xpose.msra.mxu0 0.0
    %152 = vmatprep.subr.mxu0 0.0
    %153 = vmatpush1.xpose.msra.mxu0 0.0
    %154 = vmatprep.subr.mxu0 0.0
    %155 = vmatpush1.xpose.msra.mxu0 0.0
    %156 = vmatprep.subr.mxu0 0.0
    %157 = vmatpush1.xpose.msra.mxu0 0.0
    %158 = vmatprep.subr.mxu0 0.0
    %159 = vmatpush1.xpose.msra.mxu0 0.0
    %160 = vmatprep.subr.mxu0 0.0
    %161 = vmatpush1.xpose.msra.mxu0 0.0
    %162 = vmatprep.subr.mxu0 0.0
    %163 = vmatpush1.xpose.msra.mxu0 0.0
    %164 = vmatprep.subr.mxu0 0.0
    %165 = vmatpush1.xpose.msra.mxu0 0.0
    %166 = vmatprep.subr.mxu0 0.0
    %167 = vmatpush1.xpose.msra.mxu0 0.0
    %168 = vmatprep.subr.mxu0 0.0
    %169 = vmatpush1.xpose.msra.mxu0 0.0
    %170 = vmatprep.subr.mxu0 0.0
    %171 = vmatpush1.xpose.msra.mxu0 0.0
    %172 = vmatprep.subr.mxu0 0.0
    %173 = vmatpush1.xpose.msra.mxu0 0.0
    %174 = vmatprep.subr.mxu0 0.0
    %175 = vmatpush1.xpose.msra.mxu0 0.0
    %176 = vmatprep.subr.mxu0 0.0
    %177 = vmatpush1.xpose.msra.mxu0 0.0
    %178 = vmatprep.subr.mxu0 0.0
    %179 = vmatpush1.xpose.msra.mxu0 0.0
    %180 = vmatprep.subr.mxu0 0.0
    %181 = vmatpush1.xpose.msra.mxu0 0.0
    %182 = vmatprep.mubr.f32.mxu0 0.0
    %183 = vmatmul.mubr.f32.gmra.mrb[0].mxu0 %v107
    %v184 = vpop.f32.mrb[0].mxu0
    %v185 = vadd.f32 0.0, %v184
    %v186 = vpop.f32.mrb[0].mxu0
    %187 = vdwg.mxu0
    %v188 = vmul.f32 %v185, 1.442695
    %v189 = vpow.pop %v188
    %v190 = vld [vmem:[#allocation2] sm:$0xff]
    %vm191 = vcmask 195584
    %v192 = vsel %vm191, %v189, 0.0
    %193 = vadd.xlane.f32.xlu0 %v192
    %v194 = vpop.xlane.xlu0 %193
    %v195 = vadd.f32 %v190, %v194
    %vm196 = vcmask 7168
    %197 = vst.msk [vmem:[#allocation2] sm:$0xff] %vm196, %v195
    // Predicated region
    $region42: #{tpu_custom_call.1} parent=1 // pred_check
      %p198 = pneg %p67
    $region43: #{tpu_custom_call.1} parent=1 // pred_check_branch
      %200 = sbr.rel (%p198) target = $region45
    $region44: #{tpu_custom_call.1} parent=1 // pred_region
      %v201 = vld [vmem:[#allocation5] sm:$0xff]
      %v202 = vmul.f32 %v201, %v201
      %v203 = vsel %vm75, %v202, 0.0
      %204 = vadd.xlane.f32.xlu0 %v203
      %v205 = vpop.xlane.xlu0 %204
      %v206 = vmax.f32 %v205, 1e-24
      %v207 = vrsqrt.pop %v206
      %v208 = vmul.f32 %v201, %v207
      %v209 = vmul.f32 %v73, %v201
      %v210 = vsel %vm75, %v209, 0.0
      %211 = vadd.xlane.f32.xlu0 %v210
      %v212 = vpop.xlane.xlu0 %211
      %v213 = vrsqrt.pop %v78
      %v214 = vmul.f32 %v78, %v213
      %vm215 = vcmp.eq.f32.partialorder %v78, inf
      %v216 = vsel %vm215, %v78, %v214
      %vm217 = vcmp.eq.f32.partialorder %v78, 0.0
      %v218 = vand.u32 %v78, 2147483648
      %v219 = vsel %vm217, %v218, %v216
      %v220 = vrsqrt.pop %v205
      %v221 = vmul.f32 %v205, %v220
      %vm222 = vcmp.eq.f32.partialorder %v205, inf
      %v223 = vsel %vm222, %v205, %v221
      %vm224 = vcmp.eq.f32.partialorder %v205, 0.0
      %v225 = vand.u32 %v205, 2147483648
      %v226 = vsel %vm224, %v225, %v223
      %v227 = vmul.f32 %v219, %v226
      %v228 = vmax.f32 %v227, 1e-08
      %v229 = vrcp.pop %v228
      %v230 = vmul.f32 %v212, %v229
      %v231 = vmul.f32 %v230, 1.442695
      %v232 = vpow.pop %v231
      %v233 = vmul.f32 %v81, %v81
      %v234 = vsel %vm75, %v233, 0.0
      %235 = vadd.xlane.f32.xlu0 %v234
      %v236 = vpop.xlane.xlu0 %235
      %v237 = vmul.f32 %v236, 1.442695
      %v238 = vpow.pop %v237
      %v239 = vmul.f32 %v81, %v208
      %v240 = vsel %vm75, %v239, 0.0
      %241 = vadd.xlane.f32.xlu0 %v240
      %v242 = vpop.xlane.xlu0 %241
      %v243 = vmul.f32 %v242, 1.442695
      %v244 = vpow.pop %v243
      %v245 = vld [vmem:[#allocation2] sm:$0xff]
      %v246 = vadd.f32 %v232, %v245
      %v247 = vsub.f32 %v246, %v238
      %v248 = vsub.f32 %v247, %v244
      %v249 = vlog2.pop %v248
      %v250 = vmul.f32 %v249, 0.6931472
      %v251 = vsub.f32 %v250, %v230
      %252 = vst.msk [vmem:[%s5] sm:$0xff] %vm196, %v251
    $region45: #{tpu_custom_call.1} parent=1 // pred_fallthru
      _
    // Predicated region
    $region46: #{tpu_custom_call.1} parent=1 // pred_check
      _
    $region47: #{tpu_custom_call.1} parent=1 // pred_check_branch
      %254 = sbr.rel (0) target = $region49
    $region48: #{tpu_custom_call.1} parent=1 // pred_region
      _
    $region49: #{tpu_custom_call.1} parent=1 // pred_fallthru
      _
    // Predicated region
    $region50: #{tpu_custom_call.1} parent=1 // pred_check
      _
    $region51: #{tpu_custom_call.1} parent=1 // pred_check_branch
      %256 = sbr.rel (0) target = $region53
    $region52: #{tpu_custom_call.1} parent=1 // pred_region
      _
    $region53: #{tpu_custom_call.1} parent=1 // pred_fallthru
      _
    %257 = vsyncpa [#allocation4], 1
    %258 = vsyncpa [#allocation6], 1
    %259 = vsyncpa [#allocation9], 1

</llo_original>
